<compile_context>
chip_gen: v7x
topology: tpu7x:2x2x1
jax: 0.10.0
libtpu: 0.0.40
codegen_flags: <defaults>
</compile_context>

<pallas_src>
import functools

import jax
import jax.numpy as jnp
from jax.experimental import pallas as pl
from jax.experimental.pallas import tpu as pltpu


def _round_up(x: int, m: int) -> int:
    return ((x + m - 1) // m) * m


def _pick_tile(dim: int, pref: int) -> int:
    """Largest multiple of 128 that divides `dim` and is <= min(pref, dim)."""
    t = max(128, (min(pref, dim) // 128) * 128)
    while dim % t:
        t -= 128
    return t


def _vmem_limit_bytes() -> int:
    """Per-generation scoped-VMEM budget with headroom.

    ~100 MiB on v5e/v6e (128 MiB physical), ~50 MiB on v7x (64 MiB physical).
    """
    try:
        cap = pltpu.get_tpu_info().vmem_capacity_bytes
    except Exception:  # pragma: no cover - fallback if HW query unavailable
        cap = 64 * 1024 * 1024
    return min(int(cap * 0.78), 100 * 1024 * 1024)


def _resident_block_spec(shape, index_map):
    """Full-extent, grid-invariant block (weights/biases), single-buffered.

    The index_map is constant across the grid, so the default double buffer
    never holds anything useful; pl.Buffered(1) halves its VMEM footprint.
    """
    try:
        return pl.BlockSpec(shape, index_map, pipeline_mode=pl.Buffered(1))
    except TypeError:  # older BlockSpec signature without pipeline_mode
        return pl.BlockSpec(shape, index_map)


# --------------------------------------------------------------------------
# Fused path: whole MLP in one pallas_call, weights resident in VMEM.
# --------------------------------------------------------------------------
def _fused_mlp_kernel(*refs, n_layers: int):
    """refs = (x_ref, w0, b0, w1, b1, ..., w_{L-1}, b_{L-1}, o_ref).

    x/w are bf16 (MXU fast path), biases f32. The activation `h` stays in
    vregs/VMEM for the whole chain; ReLU on every layer but the last.
    """
    x_ref = refs[0]
    o_ref = refs[-1]
    wb = refs[1:-1]

    h = x_ref[...]  # bf16 [bm, d0_pad]
    for layer in range(n_layers):
        w_ref = wb[2 * layer]
        b_ref = wb[2 * layer + 1]
        acc = jnp.dot(h, w_ref[...], preferred_element_type=jnp.float32)
        acc = acc + b_ref[...]
        if layer < n_layers - 1:
            acc = jnp.maximum(acc, 0.0)           # f32 ReLU on VPU
            h = acc.astype(jnp.bfloat16)          # back to bf16 for next MXU pass
        else:
            o_ref[...] = acc.astype(o_ref.dtype)  # lane-dense full-width store
    # TODO(synk): for very deep stacks, wrap per-layer intermediates in
    # pl.run_scoped (or cap bm) if spill shows up in the bundle dump.


# --------------------------------------------------------------------------
# Fallback path: per-layer K/N-tiled weight-streaming matmul.
# --------------------------------------------------------------------------
def _tiled_linear_kernel(x_ref, w_ref, b_ref, o_ref, acc_ref, *, apply_relu: bool):
    k = pl.program_id(2)

    @pl.when(k == 0)
    def _():
        acc_ref[...] = jnp.zeros_like(acc_ref)

    acc_ref[...] += jnp.dot(x_ref[...], w_ref[...], preferred_element_type=jnp.float32)

    @pl.when(k == pl.num_programs(2) - 1)
    def _():
        acc = acc_ref[...] + b_ref[...]
        if apply_relu:
            acc = jnp.maximum(acc, 0.0)
        o_ref[...] = acc.astype(o_ref.dtype)


def _tiled_linear(x_p, w_p, b_p, *, apply_relu, out_dtype, tm, vmem_limit):
    M, K = x_p.shape
    _, N = w_p.shape
    # N/K tiles sized toward the 256-wide MXU (v6e/v7x); 128 also fine on v5e.
    tn = _pick_tile(N, 256)
    tk = _pick_tile(K, 512)
    tm_ = min(tm, M)
    out_bytes = M * N * jnp.dtype(out_dtype).itemsize
    return pl.pallas_call(
        functools.partial(_tiled_linear_kernel, apply_relu=apply_relu),
        out_shape=jax.ShapeDtypeStruct((M, N), out_dtype),
        grid_spec=pltpu.PrefetchScalarGridSpec(
            num_scalar_prefetch=0,
            grid=(M // tm_, N // tn, K // tk),
            in_specs=[
                pl.BlockSpec((tm_, tk), lambda i, j, k: (i, k)),
                pl.BlockSpec((tk, tn), lambda i, j, k: (k, j)),
                pl.BlockSpec((1, tn), lambda i, j, k: (0, j)),
            ],
            out_specs=pl.BlockSpec((tm_, tn), lambda i, j, k: (i, j)),
            scratch_shapes=[pltpu.VMEM((tm_, tn), jnp.float32)],
        ),
        compiler_params=pltpu.CompilerParams(
            dimension_semantics=("parallel", "parallel", "arbitrary"),
            vmem_limit_bytes=vmem_limit,
        ),
        cost_estimate=pl.CostEstimate(
            flops=2 * M * N * K,
            transcendentals=0,
            bytes_accessed=x_p.nbytes + w_p.nbytes + b_p.nbytes + out_bytes,
        ),
    )(x_p, w_p, b_p)


# --------------------------------------------------------------------------
# Parameter preparation (pad ONCE, reuse across forward calls).
# --------------------------------------------------------------------------
def pad_densenet_params(params):
    """Pad weights/biases to lane-dense (x128) bf16/f32 copies, once."""
    dims = [params[0][0].shape[0]] + [w.shape[1] for (w, _) in params]
    pdims = [_round_up(d, 128) for d in dims]
    padded = []
    for li, (w, b) in enumerate(params):
        w_p = (
            jnp.zeros((pdims[li], pdims[li + 1]), jnp.bfloat16)
            .at[: w.shape[0], : w.shape[1]]
            .set(w.astype(jnp.bfloat16))
        )
        b_p = (
            jnp.zeros((1, pdims[li + 1]), jnp.float32)
            .at[:, : b.shape[1]]
            .set(b.astype(jnp.float32))
        )
        padded.append((w_p, b_p))
    # TODO(synk): optional fp8 weight path on v7x (halves resident VMEM / DMA,
    # ~2x MXU) if accuracy permits.
    return padded, dims, pdims


# --------------------------------------------------------------------------
# Forward wrapper.
# --------------------------------------------------------------------------
def densenet_forward(
    x,
    params,
    *,
    block_batch: int = 256,
    padded=None,
    out_dtype=jnp.float32,
    force_tiled: bool = False,
):
    """Forward pass matching the PyTorch Sequential:
    fc_0 -> ReLU -> ... -> fc_{L-2} -> ReLU -> fc_out (no final ReLU).

    x: [batch, in_features] f32;  params: list of (W [in, out] f32, b [1, out] f32).
    Pass `padded=pad_densenet_params(params)` to avoid re-padding per call.
    """
    if padded is None:
        padded = pad_densenet_params(params)
    padded_params, dims, pdims = padded
    n_layers = len(padded_params)

    batch, in_features = x.shape
    assert in_features == dims[0], "x feature dim does not match params"
    out_features = dims[-1]
    out_itemsize = jnp.dtype(out_dtype).itemsize

    # ---- batch tiling: sublane-aligned (x16 for bf16); >=2 grid steps when
    # batch > 16 so v7x's second TensorCore is used.
    pbatch16 = _round_up(batch, 16)
    bm = min(_round_up(block_batch, 16), pbatch16)
    if pbatch16 > 16:
        bm = min(bm, _round_up((pbatch16 + 1) // 2, 16))
    pbatch = _round_up(pbatch16, bm)

    # ---- pad activations (lane-dense features, bf16 for the MXU) ----
    x_p = (
        jnp.zeros((pbatch, pdims[0]), jnp.bfloat16)
        .at[:batch, :in_features]
        .set(x.astype(jnp.bfloat16))
    )

    vmem_limit = _vmem_limit_bytes()

    # ---- choose path: fully-resident fused MLP vs per-layer weight streaming ----
    weight_bytes = sum(w.nbytes + b.nbytes for (w, b) in padded_params)  # single-buffered
    io_bytes = 2 * bm * pdims[0] * 2 + 2 * bm * pdims[-1] * out_itemsize  # dbl-buffered x/out tiles
    act_bytes = 3 * bm * max(pdims) * 4  # headroom for live f32 intermediates
    fused_fits = (weight_bytes + io_bytes + act_bytes) <= int(0.7 * vmem_limit)

    if force_tiled or not fused_fits:
        # K/N-tiled weight streaming, one pallas_call per layer (working set ~2 tiles).
        h = x_p
        for li, (w_p, b_p) in enumerate(padded_params):
            last = li == n_layers - 1
            h = _tiled_linear(
                h, w_p, b_p,
                apply_relu=not last,
                out_dtype=out_dtype if last else jnp.bfloat16,
                tm=bm, vmem_limit=vmem_limit,
            )
        return h[:batch, :out_features]

    # ---- fused single-kernel path ----
    flat_inputs = [x_p]
    in_specs = [pl.BlockSpec((bm, pdims[0]), lambda i: (i, 0))]
    for (w_p, b_p) in padded_params:
        flat_inputs.extend([w_p, b_p])
        in_specs.append(_resident_block_spec(w_p.shape, lambda i: (0, 0)))
        in_specs.append(_resident_block_spec(b_p.shape, lambda i: (0, 0)))

    flops = 2 * pbatch * sum(pdims[i] * pdims[i + 1] for i in range(n_layers))
    bytes_accessed = x_p.nbytes + weight_bytes + pbatch * pdims[-1] * out_itemsize

    out_padded = pl.pallas_call(
        functools.partial(_fused_mlp_kernel, n_layers=n_layers),
        out_shape=jax.ShapeDtypeStruct((pbatch, pdims[-1]), out_dtype),
        grid_spec=pltpu.PrefetchScalarGridSpec(
            num_scalar_prefetch=0,
            grid=(pbatch // bm,),
            in_specs=in_specs,
            out_specs=pl.BlockSpec((bm, pdims[-1]), lambda i: (i, 0)),
        ),
        compiler_params=pltpu.CompilerParams(
            dimension_semantics=("parallel",),  # batch shardable across v7x's 2 TCs
            vmem_limit_bytes=vmem_limit,
        ),
        cost_estimate=pl.CostEstimate(
            flops=flops, transcendentals=0, bytes_accessed=bytes_accessed
        ),
    )(*flat_inputs)

    return out_padded[:batch, :out_features]


# --------------------------------------------------------------------------
# Init + references.
# --------------------------------------------------------------------------
def init_densenet_params(key, in_features, fc_sizes, out_features, dtype=jnp.float32):
    """PyTorch-style init: U(-1/sqrt(fan_in), 1/sqrt(fan_in))."""
    params = []
    dims = [in_features] + list(fc_sizes) + [out_features]
    for i in range(len(dims) - 1):
        fan_in, fan_out = dims[i], dims[i + 1]
        key, kw, kb = jax.random.split(key, 3)
        bound = 1.0 / jnp.sqrt(jnp.asarray(fan_in, dtype))
        w = jax.random.uniform(kw, (fan_in, fan_out), dtype, -bound, bound)
        b = jax.random.uniform(kb, (1, fan_out), dtype, -bound, bound)
        params.append((w, b))
    return params


def densenet_reference_bf16(x, params):
    """Plain-JAX reference with the SAME numerics (bf16 matmul, f32 accumulate)."""
    n = len(params)
    h = x.astype(jnp.bfloat16)
    for i, (w, b) in enumerate(params):
        acc = jnp.dot(h, w.astype(jnp.bfloat16), preferred_element_type=jnp.float32)
        acc = acc + b.astype(jnp.float32)
        if i < n - 1:
            h = jnp.maximum(acc, 0.0).astype(jnp.bfloat16)
        else:
            return acc


def densenet_reference_f32(x, params):
    """Full-precision reference (loose sanity check)."""
    n = len(params)
    for i, (w, b) in enumerate(params):
        x = x @ w + b
        if i < n - 1:
            x = jnp.maximum(x, 0.0)
    return x


if __name__ == "__main__":
    key = jax.random.PRNGKey(0)
    batch = 4
    in_features = 16
    fc_sizes = [32, 32]
    out_features = 8

    key, kx = jax.random.split(key)
    x = jax.random.normal(kx, (batch, in_features), jnp.float32)
    params = init_densenet_params(key, in_features, fc_sizes, out_features)

    # Pad weights/biases ONCE; reuse across calls.
    padded = pad_densenet_params(params)

    # Fused single-kernel path (fits easily in VMEM at these sizes).
    out = densenet_forward(x, params, padded=padded)
    out = jax.block_until_ready(out)
    assert out.shape == (batch, out_features)

    ref_bf16 = densenet_reference_bf16(x, params)
    assert jnp.allclose(out, ref_bf16, atol=1e-2, rtol=1e-2), "mismatch vs bf16 reference"
    ref_f32 = densenet_reference_f32(x, params)
    assert jnp.allclose(out, ref_f32, atol=5e-2, rtol=5e-2), "mismatch vs f32 reference"

    # Also exercise the K/N-tiled weight-streaming fallback (the path taken
    # automatically when resident weights exceed the per-generation VMEM budget).
    out_tiled = jax.block_until_ready(
        densenet_forward(x, params, padded=padded, force_tiled=True)
    )
    assert out_tiled.shape == (batch, out_features)
    assert jnp.allclose(out_tiled, ref_bf16, atol=1e-2, rtol=1e-2), "tiled path mismatch"

    print("KERNEL_OK")
</pallas_src>

<mosaic_0001>
module attributes {stable_mosaic.version = 11 : i64} {
  func.func @_fused_mlp_kernel(%arg0: i32, %arg1: memref<16x128xbf16, #tpu.memory_space<vmem>>, %arg2: memref<128x128xbf16, #tpu.memory_space<vmem>>, %arg3: memref<1x128xf32, #tpu.memory_space<vmem>>, %arg4: memref<128x128xbf16, #tpu.memory_space<vmem>>, %arg5: memref<1x128xf32, #tpu.memory_space<vmem>>, %arg6: memref<128x128xbf16, #tpu.memory_space<vmem>>, %arg7: memref<1x128xf32, #tpu.memory_space<vmem>>, %arg8: memref<16x128xf32, #tpu.memory_space<vmem>>) attributes {dimension_semantics = [#tpu.dimension_semantics<parallel>], iteration_bounds = array<i64: 1>, scalar_prefetch = 0 : i64, scratch_operands = 0 : i64, tpu.core_type = #tpu.core_type<tc>, window_params = [{transform_indices = @transform_0, window_bounds = array<i64: 16, 128>}, {pipeline_mode = #tpu.pipeline_mode<synchronous>, transform_indices = @transform_1, window_bounds = array<i64: 128, 128>}, {pipeline_mode = #tpu.pipeline_mode<synchronous>, transform_indices = @transform_2, window_bounds = array<i64: 1, 128>}, {pipeline_mode = #tpu.pipeline_mode<synchronous>, transform_indices = @transform_3, window_bounds = array<i64: 128, 128>}, {pipeline_mode = #tpu.pipeline_mode<synchronous>, transform_indices = @transform_4, window_bounds = array<i64: 1, 128>}, {pipeline_mode = #tpu.pipeline_mode<synchronous>, transform_indices = @transform_5, window_bounds = array<i64: 128, 128>}, {pipeline_mode = #tpu.pipeline_mode<synchronous>, transform_indices = @transform_6, window_bounds = array<i64: 1, 128>}, {transform_indices = @transform_7, window_bounds = array<i64: 16, 128>}]} {
    %c0 = arith.constant 0 : index
    %c0_0 = arith.constant 0 : index
    %0 = vector.load %arg1[%c0, %c0_0] : memref<16x128xbf16, #tpu.memory_space<vmem>>, vector<16x128xbf16>
    %c0_1 = arith.constant 0 : index
    %c0_2 = arith.constant 0 : index
    %1 = vector.load %arg2[%c0_1, %c0_2] : memref<128x128xbf16, #tpu.memory_space<vmem>>, vector<128x128xbf16>
    %cst = arith.constant dense<0.000000e+00> : vector<16x128xf32>
    %2 = tpu.matmul %0, %1, %cst {dimension_numbers = #tpu.dot_dimension_numbers<[1], [0], [0], [1], [0, 0, 1, 1], [], []>} : vector<16x128xbf16>, vector<128x128xbf16>, vector<16x128xf32> -> vector<16x128xf32>
    %c0_3 = arith.constant 0 : index
    %c0_4 = arith.constant 0 : index
    %3 = vector.load %arg3[%c0_3, %c0_4] : memref<1x128xf32, #tpu.memory_space<vmem>>, vector<1x128xf32>
    %4 = vector.broadcast %3 : vector<1x128xf32> to vector<16x128xf32>
    %5 = arith.addf %2, %4 : vector<16x128xf32>
    %cst_5 = arith.constant 0.000000e+00 : f32
    %6 = vector.broadcast %cst_5 : f32 to vector<16x128xf32>
    %7 = arith.maximumf %5, %6 : vector<16x128xf32>
    %8 = arith.truncf %7 : vector<16x128xf32> to vector<16x128xbf16>
    %c0_6 = arith.constant 0 : index
    %c0_7 = arith.constant 0 : index
    %9 = vector.load %arg4[%c0_6, %c0_7] : memref<128x128xbf16, #tpu.memory_space<vmem>>, vector<128x128xbf16>
    %cst_8 = arith.constant dense<0.000000e+00> : vector<16x128xf32>
    %10 = tpu.matmul %8, %9, %cst_8 {dimension_numbers = #tpu.dot_dimension_numbers<[1], [0], [0], [1], [0, 0, 1, 1], [], []>} : vector<16x128xbf16>, vector<128x128xbf16>, vector<16x128xf32> -> vector<16x128xf32>
    %c0_9 = arith.constant 0 : index
    %c0_10 = arith.constant 0 : index
    %11 = vector.load %arg5[%c0_9, %c0_10] : memref<1x128xf32, #tpu.memory_space<vmem>>, vector<1x128xf32>
    %12 = vector.broadcast %11 : vector<1x128xf32> to vector<16x128xf32>
    %13 = arith.addf %10, %12 : vector<16x128xf32>
    %cst_11 = arith.constant 0.000000e+00 : f32
    %14 = vector.broadcast %cst_11 : f32 to vector<16x128xf32>
    %15 = arith.maximumf %13, %14 : vector<16x128xf32>
    %16 = arith.truncf %15 : vector<16x128xf32> to vector<16x128xbf16>
    %c0_12 = arith.constant 0 : index
    %c0_13 = arith.constant 0 : index
    %17 = vector.load %arg6[%c0_12, %c0_13] : memref<128x128xbf16, #tpu.memory_space<vmem>>, vector<128x128xbf16>
    %cst_14 = arith.constant dense<0.000000e+00> : vector<16x128xf32>
    %18 = tpu.matmul %16, %17, %cst_14 {dimension_numbers = #tpu.dot_dimension_numbers<[1], [0], [0], [1], [0, 0, 1, 1], [], []>} : vector<16x128xbf16>, vector<128x128xbf16>, vector<16x128xf32> -> vector<16x128xf32>
    %c0_15 = arith.constant 0 : index
    %c0_16 = arith.constant 0 : index
    %19 = vector.load %arg7[%c0_15, %c0_16] : memref<1x128xf32, #tpu.memory_space<vmem>>, vector<1x128xf32>
    %20 = vector.broadcast %19 : vector<1x128xf32> to vector<16x128xf32>
    %21 = arith.addf %18, %20 : vector<16x128xf32>
    %c0_17 = arith.constant 0 : index
    %c0_18 = arith.constant 0 : index
    %22 = vector.load %arg8[%c0_17, %c0_18] : memref<16x128xf32, #tpu.memory_space<vmem>>, vector<16x128xf32>
    tpu.vector_store %arg8[%c0_17, %c0_18], %21 {strides = array<i32>} : memref<16x128xf32, #tpu.memory_space<vmem>>, vector<16x128xf32>,
    return
  }
  func.func @transform_0(%arg0: i32) -> (i32, i32) {
    %c0_i32 = arith.constant 0 : i32
    %c0_i32_0 = arith.constant 0 : i32
    return %arg0, %c0_i32 : i32, i32
  }
  func.func @transform_1(%arg0: i32) -> (i32, i32) {
    %c0_i32 = arith.constant 0 : i32
    %c0_i32_0 = arith.constant 0 : i32
    %c0_i32_1 = arith.constant 0 : i32
    return %c0_i32, %c0_i32_0 : i32, i32
  }
  func.func @transform_2(%arg0: i32) -> (i32, i32) {
    %c0_i32 = arith.constant 0 : i32
    %c0_i32_0 = arith.constant 0 : i32
    %c0_i32_1 = arith.constant 0 : i32
    return %c0_i32, %c0_i32_0 : i32, i32
  }
  func.func @transform_3(%arg0: i32) -> (i32, i32) {
    %c0_i32 = arith.constant 0 : i32
    %c0_i32_0 = arith.constant 0 : i32
    %c0_i32_1 = arith.constant 0 : i32
    return %c0_i32, %c0_i32_0 : i32, i32
  }
  func.func @transform_4(%arg0: i32) -> (i32, i32) {
    %c0_i32 = arith.constant 0 : i32
    %c0_i32_0 = arith.constant 0 : i32
    %c0_i32_1 = arith.constant 0 : i32
    return %c0_i32, %c0_i32_0 : i32, i32
  }
  func.func @transform_5(%arg0: i32) -> (i32, i32) {
    %c0_i32 = arith.constant 0 : i32
    %c0_i32_0 = arith.constant 0 : i32
    %c0_i32_1 = arith.constant 0 : i32
    return %c0_i32, %c0_i32_0 : i32, i32
  }
  func.func @transform_6(%arg0: i32) -> (i32, i32) {
    %c0_i32 = arith.constant 0 : i32
    %c0_i32_0 = arith.constant 0 : i32
    %c0_i32_1 = arith.constant 0 : i32
    return %c0_i32, %c0_i32_0 : i32, i32
  }
  func.func @transform_7(%arg0: i32) -> (i32, i32) {
    %c0_i32 = arith.constant 0 : i32
    %c0_i32_0 = arith.constant 0 : i32
    return %arg0, %c0_i32 : i32, i32
  }
}

</mosaic_0001>

<llo_original>
// kernel: tpu_custom_call.1
$region0: #{tpu_custom_call.1}
  #allocation0 [shape = 'u32[]', space=smem, size = 0x4, offset = 0x4, fixed_abs, tag = 'smem constant byte address 0x4 - core index']
  #allocation1 [shape = 'u32[144,128]{1,0:T(1,128)}', space=vmem, size = 0x12000, scoped, tag = 'internal scratch']
  %s0 = inlined_call_operand.hbm [shape: bf16[16,128], index: 0, kind: input, shape index: {}]
  %s1 = inlined_call_operand.hbm [shape: bf16[128,128], index: 1, kind: input, shape index: {}]
  %s2 = inlined_call_operand.vmem [shape: f32[1,128], index: 2, kind: input, shape index: {}]
  %s3 = inlined_call_operand.hbm [shape: bf16[128,128], index: 3, kind: input, shape index: {}]
  %s4 = inlined_call_operand.vmem [shape: f32[1,128], index: 4, kind: input, shape index: {}]
  %s5 = inlined_call_operand.hbm [shape: bf16[128,128], index: 5, kind: input, shape index: {}]
  %s6 = inlined_call_operand.vmem [shape: f32[1,128], index: 6, kind: input, shape index: {}]
  %s7 = inlined_call_operand.hbm [shape: f32[16,128], index: 7, kind: output, shape index: {}]
  %s8 = sld [smem:[#allocation0]]
  $region54: #{tpu_custom_call.1} parent=0
    _
  %s10 = ssub.s32 1, %s8
  %s11 = scalar_select 0, %s10, %s8
  $region1: #{tpu_custom_call.1} parent=0
    #allocation2 [shape = 'u8[4096]{0}', space=vmem, size = 0x1000, scoped, tag = 'input window, operand 0, single buffered']
    #allocation3 [shape = 's32[1]{0}', space=sflag, size = 0x4, scoped, tag = 'scoped memory for tpu_custom_call.1']
    #allocation4 [shape = 's32[1]{0}', space=sflag, size = 0x4, scoped, tag = 'scoped memory for tpu_custom_call.1']
    #allocation5 [shape = 'u8[32768]{0}', space=vmem, size = 0x8000, scoped, tag = 'input window, operand 1, single buffered']
    #allocation6 [shape = 's32[1]{0}', space=sflag, size = 0x4, scoped, tag = 'scoped memory for tpu_custom_call.1']
    #allocation7 [shape = 'u8[32768]{0}', space=vmem, size = 0x8000, scoped, tag = 'input window, operand 3, single buffered']
    #allocation8 [shape = 'u8[32768]{0}', space=vmem, size = 0x8000, scoped, tag = 'input window, operand 5, single buffered']
    #allocation9 [shape = 's32[1]{0}', space=sflag, size = 0x4, scoped, tag = 'scoped memory for tpu_custom_call.1']
    #allocation10 [shape = 'u8[8192]{0}', space=vmem, size = 0x2000, scoped, tag = 'output window, operand 0, single buffered']
    %12 = vsyncpa [#allocation3], 0
    %13 = vsyncpa [#allocation6], 0
    %14 = vsyncpa [#allocation9], 0
    %15 = vsyncpa [#allocation4], 0
    // Predicated region
    $region2: #{tpu_custom_call.1} parent=1 // pred_check
      _
    $region3: #{tpu_custom_call.1} parent=1 // pred_check_branch
      %17 = sbr.rel (0) target = $region5
    $region4: #{tpu_custom_call.1} parent=1 // pred_region
      %s19 = ssub.s32 128, 128
      %20 = vsyncadd [#allocation3], %s19
      %s21 = sshll.u32 [#allocation2], 4
      %s22 = int_to_ptr.vmem [resolvable:$true] %s21
      %27 = dma.hbm_to_vmem [thread:$0]  %s0, 128, %s22, [#allocation3], 64, 64, 4
    $region5: #{tpu_custom_call.1} parent=1 // pred_fallthru
      _
    // Predicated region
    $region6: #{tpu_custom_call.1} parent=1 // pred_check
      _
    $region7: #{tpu_custom_call.1} parent=1 // pred_check_branch
      %29 = sbr.rel (0) target = $region9
    $region8: #{tpu_custom_call.1} parent=1 // pred_region
      %s31 = ssub.s32 1024, 1024
      %32 = vsyncadd [#allocation6], %s31
      %s33 = sshll.u32 [#allocation5], 4
      %s34 = int_to_ptr.vmem [resolvable:$true] %s33
      %39 = dma.hbm_to_vmem [thread:$0]  %s1, 1024, %s34, [#allocation6], 64, 64, 4
    $region9: #{tpu_custom_call.1} parent=1 // pred_fallthru
      _
    // Predicated region
    $region10: #{tpu_custom_call.1} parent=1 // pred_check
      _
    $region11: #{tpu_custom_call.1} parent=1 // pred_check_branch
      %41 = sbr.rel (0) target = $region13
    $region12: #{tpu_custom_call.1} parent=1 // pred_region
      _
    $region13: #{tpu_custom_call.1} parent=1 // pred_fallthru
      _
    // Predicated region
    $region14: #{tpu_custom_call.1} parent=1 // pred_check
      _
    $region15: #{tpu_custom_call.1} parent=1 // pred_check_branch
      %43 = sbr.rel (0) target = $region17
    $region16: #{tpu_custom_call.1} parent=1 // pred_region
      %s45 = ssub.s32 1024, 1024
      %46 = vsyncadd [#allocation6], %s45
      %s47 = sshll.u32 [#allocation7], 4
      %s48 = int_to_ptr.vmem [resolvable:$true] %s47
      %53 = dma.hbm_to_vmem [thread:$0]  %s3, 1024, %s48, [#allocation6], 64, 64, 4
    $region17: #{tpu_custom_call.1} parent=1 // pred_fallthru
      _
    // Predicated region
    $region18: #{tpu_custom_call.1} parent=1 // pred_check
      _
    $region19: #{tpu_custom_call.1} parent=1 // pred_check_branch
      %55 = sbr.rel (0) target = $region21
    $region20: #{tpu_custom_call.1} parent=1 // pred_region
      _
    $region21: #{tpu_custom_call.1} parent=1 // pred_fallthru
      _
    // Predicated region
    $region22: #{tpu_custom_call.1} parent=1 // pred_check
      _
    $region23: #{tpu_custom_call.1} parent=1 // pred_check_branch
      %57 = sbr.rel (0) target = $region25
    $region24: #{tpu_custom_call.1} parent=1 // pred_region
      %s59 = ssub.s32 1024, 1024
      %60 = vsyncadd [#allocation9], %s59
      %s61 = sshll.u32 [#allocation8], 4
      %s62 = int_to_ptr.vmem [resolvable:$true] %s61
      %67 = dma.hbm_to_vmem [thread:$0]  %s5, 1024, %s62, [#allocation9], 64, 64, 4
    $region25: #{tpu_custom_call.1} parent=1 // pred_fallthru
      _
    // Predicated region
    $region26: #{tpu_custom_call.1} parent=1 // pred_check
      _
    $region27: #{tpu_custom_call.1} parent=1 // pred_check_branch
      %69 = sbr.rel (0) target = $region29
    $region28: #{tpu_custom_call.1} parent=1 // pred_region
      _
    $region29: #{tpu_custom_call.1} parent=1 // pred_fallthru
      _
    // Predicated region
    $region30: #{tpu_custom_call.1} parent=1 // pred_check
      _
    $region31: #{tpu_custom_call.1} parent=1 // pred_check_branch
      %71 = sbr.rel (0) target = $region33
    $region32: #{tpu_custom_call.1} parent=1 // pred_region
      %72 = dma.done [#allocation3], 128
    $region33: #{tpu_custom_call.1} parent=1 // pred_fallthru
      _
    // Predicated region
    $region34: #{tpu_custom_call.1} parent=1 // pred_check
      _
    $region35: #{tpu_custom_call.1} parent=1 // pred_check_branch
      %74 = sbr.rel (0) target = $region37
    $region36: #{tpu_custom_call.1} parent=1 // pred_region
      %75 = dma.done [#allocation6], 1024
    $region37: #{tpu_custom_call.1} parent=1 // pred_fallthru
      _
    // Predicated region
    $region38: #{tpu_custom_call.1} parent=1 // pred_check
      _
    $region39: #{tpu_custom_call.1} parent=1 // pred_check_branch
      %77 = sbr.rel (0) target = $region41
    $region40: #{tpu_custom_call.1} parent=1 // pred_region
      %78 = dma.done [#allocation6], 1024
    $region41: #{tpu_custom_call.1} parent=1 // pred_fallthru
      _
    // Predicated region
    $region42: #{tpu_custom_call.1} parent=1 // pred_check
      _
    $region43: #{tpu_custom_call.1} parent=1 // pred_check_branch
      %80 = sbr.rel (0) target = $region45
    $region44: #{tpu_custom_call.1} parent=1 // pred_region
      %81 = dma.done [#allocation9], 1024
    $region45: #{tpu_custom_call.1} parent=1 // pred_fallthru
      _
    %v83 = vld [vmem:[#allocation2] sm:$0xf]
    %v84 = vld [vmem:[#allocation2 + $0x4] sm:$0xf]
    %v85 = vld [vmem:[#allocation5] sm:$0xf]
    %v86 = vld [vmem:[#allocation5 + $0x4] sm:$0xf]
    %v87 = vld [vmem:[#allocation5 + $0x8] sm:$0xf]
    %v88 = vld [vmem:[#allocation5 + $0xc] sm:$0xf]
    %v89 = vld [vmem:[#allocation5 + $0x10] sm:$0xf]
    %v90 = vld [vmem:[#allocation5 + $0x14] sm:$0xf]
    %v91 = vld [vmem:[#allocation5 + $0x18] sm:$0xf]
    %v92 = vld [vmem:[#allocation5 + $0x1c] sm:$0xf]
    %v93 = vld [vmem:[#allocation5 + $0x20] sm:$0xf]
    %v94 = vld [vmem:[#allocation5 + $0x24] sm:$0xf]
    %v95 = vld [vmem:[#allocation5 + $0x28] sm:$0xf]
    %v96 = vld [vmem:[#allocation5 + $0x2c] sm:$0xf]
    %v97 = vld [vmem:[#allocation5 + $0x30] sm:$0xf]
    %v98 = vld [vmem:[#allocation5 + $0x34] sm:$0xf]
    %v99 = vld [vmem:[#allocation5 + $0x38] sm:$0xf]
    %v100 = vld [vmem:[#allocation5 + $0x3c] sm:$0xf]
    %v101 = vld [vmem:[%s2] sm:$0x1]
    %v103 = vlaneseq
    %v104 = vshrl.u32 %v103, 7
    %v105 = vsub.s32 0, %v104
    %v106 = vrot.slane %v101, %v105
    %v110 = vunpack.c.l.b16 %v83
    %v111 = vunpack.c.l.b16 %v84
    %v112 = vpack.c.b16 %v111, %v110
    %v130 = vunpack.c.l.b16 %v85
    %v131 = vunpack.c.l.b16 %v86
    %v132 = vunpack.c.l.b16 %v87
    %v133 = vunpack.c.l.b16 %v88
    %v134 = vunpack.c.l.b16 %v89
    %v135 = vunpack.c.l.b16 %v90
    %v136 = vunpack.c.l.b16 %v91
    %v137 = vunpack.c.l.b16 %v92
    %v138 = vunpack.c.l.b16 %v93
    %v139 = vunpack.c.l.b16 %v94
    %v140 = vunpack.c.l.b16 %v95
    %v141 = vunpack.c.l.b16 %v96
    %v142 = vunpack.c.l.b16 %v97
    %v143 = vunpack.c.l.b16 %v98
    %v144 = vunpack.c.l.b16 %v99
    %v145 = vunpack.c.l.b16 %v100
    %v146 = vpack.c.b16 %v131, %v130
    %v147 = vpack.c.b16 %v133, %v132
    %v148 = vpack.c.b16 %v135, %v134
    %v149 = vpack.c.b16 %v137, %v136
    %v150 = vpack.c.b16 %v139, %v138
    %v151 = vpack.c.b16 %v141, %v140
    %v152 = vpack.c.b16 %v143, %v142
    %v153 = vpack.c.b16 %v145, %v144
    %162 = vmatprep.subr.bf16.mxu0 0
    %163 = vmatpush1.bf16.msra.mxu0 %v146
    %164 = vmatprep.subr.bf16.mxu0 0
    %165 = vmatpush1.bf16.msra.mxu0 %v147
    %166 = vmatprep.subr.bf16.mxu0 0
    %167 = vmatpush1.bf16.msra.mxu0 %v148
    %168 = vmatprep.subr.bf16.mxu0 0
    %169 = vmatpush1.bf16.msra.mxu0 %v149
    %170 = vmatprep.subr.bf16.mxu0 0
    %171 = vmatpush1.bf16.msra.mxu0 %v150
    %172 = vmatprep.subr.bf16.mxu0 0
    %173 = vmatpush1.bf16.msra.mxu0 %v151
    %174 = vmatprep.subr.bf16.mxu0 0
    %175 = vmatpush1.bf16.msra.mxu0 %v152
    %176 = vmatprep.subr.bf16.mxu0 0
    %177 = vmatpush1.bf16.msra.mxu0 %v153
    %178 = vmatprep.subr.bf16.mxu0 0
    %179 = vmatpush1.bf16.msra.mxu0 0
    %180 = vmatprep.subr.bf16.mxu0 0
    %181 = vmatpush1.bf16.msra.mxu0 0
    %182 = vmatprep.subr.bf16.mxu0 0
    %183 = vmatpush1.bf16.msra.mxu0 0
    %184 = vmatprep.subr.bf16.mxu0 0
    %185 = vmatpush1.bf16.msra.mxu0 0
    %186 = vmatprep.subr.bf16.mxu0 0
    %187 = vmatpush1.bf16.msra.mxu0 0
    %188 = vmatprep.subr.bf16.mxu0 0
    %189 = vmatpush1.bf16.msra.mxu0 0
    %190 = vmatprep.subr.bf16.mxu0 0
    %191 = vmatpush1.bf16.msra.mxu0 0
    %192 = vmatprep.subr.bf16.mxu0 0
    %193 = vmatpush1.bf16.msra.mxu0 0
    %194 = vmatprep.mubr.bf16.mxu0 0
    %195 = vmatmul.mubr.bf16.gmra.mrb[0].mxu0 %v112
    %v196 = vpop.f32.mrb[0].mxu0
    %v197 = vadd.f32 %v106, %v196
    %v198 = vpop.f32.mrb[0].mxu0
    %v199 = vpop.f32.mrb[0].mxu0
    %v200 = vadd.f32 %v106, %v199
    %v201 = vpop.f32.mrb[0].mxu0
    %202 = vdwg.mxu0
    %v203 = vmax.f32 %v197, 0.0
    %v204 = vmax.f32 %v200, 0.0
    %v205 = vpack.c.bf16 %v204, %v203
    %v206 = vld [vmem:[#allocation7] sm:$0xf]
    %v207 = vld [vmem:[#allocation7 + $0x4] sm:$0xf]
    %v208 = vld [vmem:[#allocation7 + $0x8] sm:$0xf]
    %v209 = vld [vmem:[#allocation7 + $0xc] sm:$0xf]
    %v210 = vld [vmem:[#allocation7 + $0x10] sm:$0xf]
    %v211 = vld [vmem:[#allocation7 + $0x14] sm:$0xf]
    %v212 = vld [vmem:[#allocation7 + $0x18] sm:$0xf]
    %v213 = vld [vmem:[#allocation7 + $0x1c] sm:$0xf]
    %v214 = vld [vmem:[#allocation7 + $0x20] sm:$0xf]
    %v215 = vld [vmem:[#allocation7 + $0x24] sm:$0xf]
    %v216 = vld [vmem:[#allocation7 + $0x28] sm:$0xf]
    %v217 = vld [vmem:[#allocation7 + $0x2c] sm:$0xf]
    %v218 = vld [vmem:[#allocation7 + $0x30] sm:$0xf]
    %v219 = vld [vmem:[#allocation7 + $0x34] sm:$0xf]
    %v220 = vld [vmem:[#allocation7 + $0x38] sm:$0xf]
    %v221 = vld [vmem:[#allocation7 + $0x3c] sm:$0xf]
    %v222 = vld [vmem:[%s4] sm:$0x1]
    %v224 = vlaneseq
    %v225 = vshrl.u32 %v224, 7
    %v226 = vsub.s32 0, %v225
    %v227 = vrot.slane %v222, %v226
    %v245 = vunpack.c.l.b16 %v206
    %v246 = vunpack.c.l.b16 %v207
    %v247 = vunpack.c.l.b16 %v208
    %v248 = vunpack.c.l.b16 %v209
    %v249 = vunpack.c.l.b16 %v210
    %v250 = vunpack.c.l.b16 %v211
    %v251 = vunpack.c.l.b16 %v212
    %v252 = vunpack.c.l.b16 %v213
    %v253 = vunpack.c.l.b16 %v214
    %v254 = vunpack.c.l.b16 %v215
    %v255 = vunpack.c.l.b16 %v216
    %v256 = vunpack.c.l.b16 %v217
    %v257 = vunpack.c.l.b16 %v218
    %v258 = vunpack.c.l.b16 %v219
    %v259 = vunpack.c.l.b16 %v220
    %v260 = vunpack.c.l.b16 %v221
    %v261 = vpack.c.b16 %v246, %v245
    %v262 = vpack.c.b16 %v248, %v247
    %v263 = vpack.c.b16 %v250, %v249
    %v264 = vpack.c.b16 %v252, %v251
    %v265 = vpack.c.b16 %v254, %v253
    %v266 = vpack.c.b16 %v256, %v255
    %v267 = vpack.c.b16 %v258, %v257
    %v268 = vpack.c.b16 %v260, %v259
    %277 = vmatprep.subr.bf16.mxu0 0
    %278 = vmatpush1.bf16.msra.mxu0 %v261
    %279 = vmatprep.subr.bf16.mxu0 0
    %280 = vmatpush1.bf16.msra.mxu0 %v262
    %281 = vmatprep.subr.bf16.mxu0 0
    %282 = vmatpush1.bf16.msra.mxu0 %v263
    %283 = vmatprep.subr.bf16.mxu0 0
    %284 = vmatpush1.bf16.msra.mxu0 %v264
    %285 = vmatprep.subr.bf16.mxu0 0
    %286 = vmatpush1.bf16.msra.mxu0 %v265
    %287 = vmatprep.subr.bf16.mxu0 0
    %288 = vmatpush1.bf16.msra.mxu0 %v266
    %289 = vmatprep.subr.bf16.mxu0 0
    %290 = vmatpush1.bf16.msra.mxu0 %v267
    %291 = vmatprep.subr.bf16.mxu0 0
    %292 = vmatpush1.bf16.msra.mxu0 %v268
    %293 = vmatprep.subr.bf16.mxu0 0
    %294 = vmatpush1.bf16.msra.mxu0 0
    %295 = vmatprep.subr.bf16.mxu0 0
    %296 = vmatpush1.bf16.msra.mxu0 0
    %297 = vmatprep.subr.bf16.mxu0 0
    %298 = vmatpush1.bf16.msra.mxu0 0
    %299 = vmatprep.subr.bf16.mxu0 0
    %300 = vmatpush1.bf16.msra.mxu0 0
    %301 = vmatprep.subr.bf16.mxu0 0
    %302 = vmatpush1.bf16.msra.mxu0 0
    %303 = vmatprep.subr.bf16.mxu0 0
    %304 = vmatpush1.bf16.msra.mxu0 0
    %305 = vmatprep.subr.bf16.mxu0 0
    %306 = vmatpush1.bf16.msra.mxu0 0
    %307 = vmatprep.subr.bf16.mxu0 0
    %308 = vmatpush1.bf16.msra.mxu0 0
    %309 = vmatprep.mubr.bf16.mxu0 0
    %310 = vmatmul.mubr.bf16.gmra.mrb[0].mxu0 %v205
    %v311 = vpop.f32.mrb[0].mxu0
    %v312 = vadd.f32 %v227, %v311
    %v313 = vpop.f32.mrb[0].mxu0
    %v314 = vpop.f32.mrb[0].mxu0
    %v315 = vadd.f32 %v227, %v314
    %v316 = vpop.f32.mrb[0].mxu0
    %317 = vdwg.mxu0
    %v318 = vmax.f32 %v312, 0.0
    %v319 = vmax.f32 %v315, 0.0
    %v320 = vpack.c.bf16 %v319, %v318
    %v321 = vld [vmem:[#allocation8] sm:$0xf]
    %v322 = vld [vmem:[#allocation8 + $0x4] sm:$0xf]
    %v323 = vld [vmem:[#allocation8 + $0x8] sm:$0xf]
    %v324 = vld [vmem:[#allocation8 + $0xc] sm:$0xf]
    %v325 = vld [vmem:[#allocation8 + $0x10] sm:$0xf]
    %v326 = vld [vmem:[#allocation8 + $0x14] sm:$0xf]
    %v327 = vld [vmem:[#allocation8 + $0x18] sm:$0xf]
    %v328 = vld [vmem:[#allocation8 + $0x1c] sm:$0xf]
    %v329 = vld [vmem:[#allocation8 + $0x20] sm:$0xf]
    %v330 = vld [vmem:[#allocation8 + $0x24] sm:$0xf]
    %v331 = vld [vmem:[#allocation8 + $0x28] sm:$0xf]
    %v332 = vld [vmem:[#allocation8 + $0x2c] sm:$0xf]
    %v333 = vld [vmem:[#allocation8 + $0x30] sm:$0xf]
    %v334 = vld [vmem:[#allocation8 + $0x34] sm:$0xf]
    %v335 = vld [vmem:[#allocation8 + $0x38] sm:$0xf]
    %v336 = vld [vmem:[#allocation8 + $0x3c] sm:$0xf]
    %v337 = vld [vmem:[%s6] sm:$0x1]
    %v339 = vlaneseq
    %v340 = vshrl.u32 %v339, 7
    %v341 = vsub.s32 0, %v340
    %v342 = vrot.slane %v337, %v341
    %v360 = vunpack.c.l.b16 %v321
    %v361 = vunpack.c.l.b16 %v322
    %v362 = vunpack.c.l.b16 %v323
    %v363 = vunpack.c.l.b16 %v324
    %v364 = vunpack.c.l.b16 %v325
    %v365 = vunpack.c.l.b16 %v326
    %v366 = vunpack.c.l.b16 %v327
    %v367 = vunpack.c.l.b16 %v328
    %v368 = vunpack.c.l.b16 %v329
    %v369 = vunpack.c.l.b16 %v330
    %v370 = vunpack.c.l.b16 %v331
    %v371 = vunpack.c.l.b16 %v332
    %v372 = vunpack.c.l.b16 %v333
    %v373 = vunpack.c.l.b16 %v334
    %v374 = vunpack.c.l.b16 %v335
    %v375 = vunpack.c.l.b16 %v336
    %v376 = vpack.c.b16 %v361, %v360
    %v377 = vpack.c.b16 %v363, %v362
    %v378 = vpack.c.b16 %v365, %v364
    %v379 = vpack.c.b16 %v367, %v366
    %v380 = vpack.c.b16 %v369, %v368
    %v381 = vpack.c.b16 %v371, %v370
    %v382 = vpack.c.b16 %v373, %v372
    %v383 = vpack.c.b16 %v375, %v374
    %392 = vmatprep.subr.bf16.mxu0 0
    %393 = vmatpush1.bf16.msra.mxu0 %v376
    %394 = vmatprep.subr.bf16.mxu0 0
    %395 = vmatpush1.bf16.msra.mxu0 %v377
    %396 = vmatprep.subr.bf16.mxu0 0
    %397 = vmatpush1.bf16.msra.mxu0 %v378
    %398 = vmatprep.subr.bf16.mxu0 0
    %399 = vmatpush1.bf16.msra.mxu0 %v379
    %400 = vmatprep.subr.bf16.mxu0 0
    %401 = vmatpush1.bf16.msra.mxu0 %v380
    %402 = vmatprep.subr.bf16.mxu0 0
    %403 = vmatpush1.bf16.msra.mxu0 %v381
    %404 = vmatprep.subr.bf16.mxu0 0
    %405 = vmatpush1.bf16.msra.mxu0 %v382
    %406 = vmatprep.subr.bf16.mxu0 0
    %407 = vmatpush1.bf16.msra.mxu0 %v383
    %408 = vmatprep.subr.bf16.mxu0 0
    %409 = vmatpush1.bf16.msra.mxu0 0
    %410 = vmatprep.subr.bf16.mxu0 0
    %411 = vmatpush1.bf16.msra.mxu0 0
    %412 = vmatprep.subr.bf16.mxu0 0
    %413 = vmatpush1.bf16.msra.mxu0 0
    %414 = vmatprep.subr.bf16.mxu0 0
    %415 = vmatpush1.bf16.msra.mxu0 0
    %416 = vmatprep.subr.bf16.mxu0 0
    %417 = vmatpush1.bf16.msra.mxu0 0
    %418 = vmatprep.subr.bf16.mxu0 0
    %419 = vmatpush1.bf16.msra.mxu0 0
    %420 = vmatprep.subr.bf16.mxu0 0
    %421 = vmatpush1.bf16.msra.mxu0 0
    %422 = vmatprep.subr.bf16.mxu0 0
    %423 = vmatpush1.bf16.msra.mxu0 0
    %424 = vmatprep.mubr.bf16.mxu0 0
    %425 = vmatmul.mubr.bf16.gmra.mrb[0].mxu0 %v320
    %v426 = vpop.f32.mrb[0].mxu0
    %v427 = vadd.f32 %v342, %v426
    %v428 = vpop.f32.mrb[0].mxu0
    %v429 = vpop.f32.mrb[0].mxu0
    %v430 = vadd.f32 %v342, %v429
    %v431 = vpop.f32.mrb[0].mxu0
    %432 = vdwg.mxu0
    %433 = vst [vmem:[#allocation10] sm:$0xff] %v427
    %434 = vst [vmem:[#allocation10 + $0x8] sm:$0xff] %v430
    // Predicated region
    $region46: #{tpu_custom_call.1} parent=1 // pred_check
      _
    $region47: #{tpu_custom_call.1} parent=1 // pred_check_branch
      %436 = sbr.rel (0) target = $region49
    $region48: #{tpu_custom_call.1} parent=1 // pred_region
      %s438 = ssub.s32 256, 256
      %439 = vsyncadd [#allocation4], %s438
      %s440 = sshll.u32 [#allocation10], 4
      %s441 = int_to_ptr.vmem [resolvable:$true] %s440
      %446 = dma.vmem_to_hbm [thread:$0]  %s441, 256, %s7, [#allocation4], 128, 128, 8
    $region49: #{tpu_custom_call.1} parent=1 // pred_fallthru
      _
    // Predicated region
    $region50: #{tpu_custom_call.1} parent=1 // pred_check
      _
    $region51: #{tpu_custom_call.1} parent=1 // pred_check_branch
      %448 = sbr.rel (0) target = $region53
    $region52: #{tpu_custom_call.1} parent=1 // pred_region
      %449 = dma.done [#allocation4], 256
    $region53: #{tpu_custom_call.1} parent=1 // pred_fallthru
      _
    %450 = vsyncpa [#allocation3], 1
    %451 = vsyncpa [#allocation6], 1
    %452 = vsyncpa [#allocation9], 1
    %453 = vsyncpa [#allocation4], 1

</llo_original>
